<compile_context>
chip_gen: v7x
topology: tpu7x:2x2x1
jax: 0.10.0
libtpu: 0.0.40
codegen_flags: <defaults>
</compile_context>

<pallas_src>
import functools

import jax
import jax.numpy as jnp
from jax.experimental import pallas as pl
from jax.experimental.pallas import tpu as pltpu


def _manual_layernorm_kernel(x_ref, o_ref, *, eps):
    # x_ref / o_ref: (tile_rows, hidden) VMEM tiles. Stats are computed in f32.
    x = x_ref[...]
    xf = x.astype(jnp.float32)
    n = jnp.float32(x.shape[-1])

    # Traversal 1: both moments from a single read of the tile.
    # NOTE: var = E[x^2] - mean^2 can lose precision when |mean| >> std; stats
    # are kept in f32 and var is clamped at 0. For LayerNorm-style activations
    # this stays well within 1e-5 of the two-pass form.
    s1 = jnp.sum(xf, axis=-1, keepdims=True)
    s2 = jnp.sum(xf * xf, axis=-1, keepdims=True)
    mean = s1 / n
    var = jnp.maximum(s2 / n - mean * mean, 0.0)

    # Per-row 1/(std + eps) on the EUP (full precision; approx=True would break
    # the 1e-5 tolerance), then broadcast-multiplied into the tile.
    inv = pl.reciprocal(jnp.sqrt(var) + eps, approx=False)

    # Traversal 2: normalize and store.
    if jnp.dtype(o_ref.dtype) == jnp.dtype(jnp.bfloat16):
        # bf16 VALU path (v6e/v7x): halves VALU work and vreg traffic for the
        # output pass; output is bf16 anyway so only one rounding step changes.
        o_ref[...] = (x - mean.astype(x.dtype)) * inv.astype(x.dtype)
    else:
        o_ref[...] = ((xf - mean) * inv).astype(o_ref.dtype)


def _vmem_capacity_bytes():
    try:
        return int(pltpu.get_tpu_info().vmem_capacity_bytes)
    except Exception:
        # Conservative fallback: v7x has 64 MiB per TensorCore.
        return 64 << 20


def _choose_tile_rows(rows, hidden, itemsize):
    """Row tile sized for ~2 MiB (HBM roofline is reached by ~1 MiB-class
    tiles), rounded to the sublane multiple, preferring >= 8 grid steps so the
    'parallel' axis shards/pipelines well across v7x's two TensorCores."""
    # Sub-32-bit dtypes pack 16 sublanes per vreg.
    mult = 16 if itemsize < 4 else 8

    max_tile_bytes = 2 << 20
    t = max(max_tile_bytes // max(hidden * itemsize, 1), mult)
    t = min(t, 1024)
    t = max((t // mult) * mult, mult)

    # Don't exceed the (sublane-rounded) number of rows.
    rows_up = -(-rows // mult) * mult
    t = min(t, rows_up)

    # Prefer >= 8 grid steps (v7x: >= 4 double-buffered steps per TC).
    target_steps = 8
    while t > mult and -(-rows // t) < target_steps:
        t = max(((t // 2) // mult) * mult, mult)
    return t


def manual_layer_norm(x, eps=1e-5):
    """Applies ManualLayerNorm over the last axis of x using a Pallas TPU kernel."""
    orig_shape = x.shape
    hidden = orig_shape[-1]
    rows = 1
    for d in orig_shape[:-1]:
        rows *= d
    x2d = x.reshape(rows, hidden)

    itemsize = jnp.dtype(x.dtype).itemsize
    tile_rows = _choose_tile_rows(rows, hidden, itemsize)

    # No padding / slicing: Pallas masks the ragged final block. Rows are
    # independent, so unspecified data in the padded sublanes of the last block
    # cannot contaminate valid rows, and its OOB writes are dropped.
    grid = (pl.cdiv(rows, tile_rows),)

    # VMEM: double-buffered in + out tiles (I/O dtype) plus ~3 materialized f32
    # full-tile temporaries (upcast x, x*x, pre-cast product) + 25% margin,
    # capped at 85% of physical VMEM to leave compiler headroom.
    vmem_cap = _vmem_capacity_bytes()
    tile_io = tile_rows * hidden * itemsize
    tile_f32 = tile_rows * hidden * 4
    needed = int((4 * tile_io + 3 * tile_f32) * 1.25) + (2 << 20)
    vmem_limit = int(min(int(0.85 * vmem_cap), max(needed, 32 << 20)))

    kernel = functools.partial(_manual_layernorm_kernel, eps=eps)

    out2d = pl.pallas_call(
        kernel,
        out_shape=jax.ShapeDtypeStruct((rows, hidden), x.dtype),
        grid_spec=pltpu.PrefetchScalarGridSpec(
            num_scalar_prefetch=0,
            grid=grid,
            in_specs=[pl.BlockSpec((tile_rows, hidden), lambda i: (i, 0))],
            out_specs=pl.BlockSpec((tile_rows, hidden), lambda i: (i, 0)),
        ),
        compiler_params=pltpu.CompilerParams(
            dimension_semantics=("parallel",),
            vmem_limit_bytes=vmem_limit,
        ),
        # Mem-bound streaming op: read + write each element once.
        cost_estimate=pl.CostEstimate(
            flops=6 * rows * hidden,
            transcendentals=2 * rows,
            bytes_accessed=2 * rows * hidden * itemsize,
        ),
    )(x2d)

    return out2d.reshape(orig_shape)


def _reference(x, eps=1e-5):
    xf = x.astype(jnp.float32)
    mean = jnp.mean(xf, axis=-1, keepdims=True)
    var = jnp.mean((xf - mean) ** 2, axis=-1, keepdims=True)
    std = jnp.sqrt(var)
    return ((xf - mean) / (std + eps)).astype(x.dtype)


if __name__ == "__main__":
    key = jax.random.PRNGKey(0)
    k0, k1, k2 = jax.random.split(key, 3)
    eps = 1e-5

    # Primary check: batch=2, seq=8, hidden=32, f32.
    x = jax.random.normal(k0, (2, 8, 32), dtype=jnp.float32)
    out = jax.block_until_ready(manual_layer_norm(x, eps=eps))
    ref = _reference(x, eps=eps)
    assert out.shape == x.shape
    assert jnp.allclose(out, ref, atol=1e-5, rtol=1e-5), "f32 mismatch vs reference"

    # Ragged-rows check: rows=15 is not a multiple of the 8-row tile, locking
    # in the no-padding / masked-final-block path.
    xr = jax.random.normal(k1, (3, 5, 32), dtype=jnp.float32)
    outr = jax.block_until_ready(manual_layer_norm(xr, eps=eps))
    refr = _reference(xr, eps=eps)
    assert outr.shape == xr.shape
    assert jnp.allclose(outr, refr, atol=1e-5, rtol=1e-5), "ragged-rows mismatch"

    # bf16 smoke check (exercises the bf16 normalize path); loose tolerance
    # because the final pass intentionally rounds in bf16.
    xb = jax.random.normal(k2, (2, 8, 256), dtype=jnp.bfloat16)
    outb = jax.block_until_ready(manual_layer_norm(xb, eps=eps))
    refb = _reference(xb, eps=eps)
    assert outb.shape == xb.shape
    assert jnp.allclose(outb.astype(jnp.float32), refb.astype(jnp.float32),
                        atol=1e-1, rtol=1e-1), "bf16 mismatch"

    print("KERNEL_OK")
</pallas_src>

<mosaic_0001>
module attributes {stable_mosaic.version = 11 : i64} {
  func.func @_manual_layernorm_kernel(%arg0: i32, %arg1: memref<8x32xf32, #tpu.memory_space<vmem>>, %arg2: memref<8x32xf32, #tpu.memory_space<vmem>>) attributes {dimension_semantics = [#tpu.dimension_semantics<parallel>], iteration_bounds = array<i64: 2>, scalar_prefetch = 0 : i64, scratch_operands = 0 : i64, tpu.core_type = #tpu.core_type<tc>, window_params = [{transform_indices = @transform_0, window_bounds = array<i64: 8, 32>}, {transform_indices = @transform_1, window_bounds = array<i64: 8, 32>}]} {
    %c0 = arith.constant 0 : index
    %c0_0 = arith.constant 0 : index
    %0 = vector.load %arg1[%c0, %c0_0] : memref<8x32xf32, #tpu.memory_space<vmem>>, vector<8x32xf32>
    %cst = arith.constant dense<0.000000e+00> : vector<8xf32>
    %1 = vector.multi_reduction <add>, %0, %cst [1] : vector<8x32xf32> to vector<8xf32>
    %2 = vector.shape_cast %1 : vector<8xf32> to vector<8x1xf32>
    %3 = arith.mulf %0, %0 : vector<8x32xf32>
    %cst_1 = arith.constant dense<0.000000e+00> : vector<8xf32>
    %4 = vector.multi_reduction <add>, %3, %cst_1 [1] : vector<8x32xf32> to vector<8xf32>
    %5 = vector.shape_cast %4 : vector<8xf32> to vector<8x1xf32>
    %cst_2 = arith.constant 3.200000e+01 : f32
    %6 = vector.broadcast %cst_2 : f32 to vector<8x1xf32>
    %7 = arith.divf %2, %6 : vector<8x1xf32>
    %cst_3 = arith.constant 3.200000e+01 : f32
    %8 = vector.broadcast %cst_3 : f32 to vector<8x1xf32>
    %9 = arith.divf %5, %8 : vector<8x1xf32>
    %10 = arith.mulf %7, %7 : vector<8x1xf32>
    %11 = arith.subf %9, %10 : vector<8x1xf32>
    %cst_4 = arith.constant 0.000000e+00 : f32
    %12 = vector.broadcast %cst_4 : f32 to vector<8x1xf32>
    %13 = arith.maximumf %11, %12 : vector<8x1xf32>
    %14 = math.sqrt %13 : vector<8x1xf32>
    %cst_5 = arith.constant 9.99999974E-6 : f32
    %15 = vector.broadcast %cst_5 : f32 to vector<8x1xf32>
    %16 = arith.addf %14, %15 : vector<8x1xf32>
    %17 = tpu.reciprocal %16 : vector<8x1xf32> -> vector<8x1xf32>
    %18 = vector.broadcast %7 : vector<8x1xf32> to vector<8x32xf32>
    %19 = arith.subf %0, %18 : vector<8x32xf32>
    %20 = vector.broadcast %17 : vector<8x1xf32> to vector<8x32xf32>
    %21 = arith.mulf %19, %20 : vector<8x32xf32>
    %c0_6 = arith.constant 0 : index
    %c0_7 = arith.constant 0 : index
    %22 = vector.load %arg2[%c0_6, %c0_7] : memref<8x32xf32, #tpu.memory_space<vmem>>, vector<8x32xf32>
    tpu.vector_store %arg2[%c0_6, %c0_7], %21 {strides = array<i32>} : memref<8x32xf32, #tpu.memory_space<vmem>>, vector<8x32xf32>,
    return
  }
  func.func @transform_0(%arg0: i32) -> (i32, i32) {
    %c0_i32 = arith.constant 0 : i32
    %c0_i32_0 = arith.constant 0 : i32
    return %arg0, %c0_i32 : i32, i32
  }
  func.func @transform_1(%arg0: i32) -> (i32, i32) {
    %c0_i32 = arith.constant 0 : i32
    %c0_i32_0 = arith.constant 0 : i32
    return %arg0, %c0_i32 : i32, i32
  }
}

</mosaic_0001>

<llo_original>
// kernel: tpu_custom_call.1
$region0: #{tpu_custom_call.1}
  #allocation0 [shape = 'u32[]', space=smem, size = 0x4, offset = 0x4, fixed_abs, tag = 'smem constant byte address 0x4 - core index']
  #allocation1 [shape = 'u32[144,128]{1,0:T(1,128)}', space=vmem, size = 0x12000, scoped, tag = 'internal scratch']
  %s0 = inlined_call_operand.hbm [shape: f32[16,32], index: 0, kind: input, shape index: {}]
  %s1 = inlined_call_operand.hbm [shape: f32[16,32], index: 1, kind: output, shape index: {}]
  %s2 = sld [smem:[#allocation0]]
  $region41: #{tpu_custom_call.1} parent=0
    _
  %s4 = ssub.s32 1, %s2
  %s5 = scalar_select 0, %s4, %s2
  $region1: #{tpu_custom_call.1} parent=0
    #allocation2 [shape = 'u8[8192]{0}', space=vmem, size = 0x2000, scoped, tag = 'input window, operand 0']
    #allocation3 [shape = 's32[2]{0}', space=sflag, size = 0x8, scoped, tag = 'scoped memory for tpu_custom_call.1']
    #allocation4 [shape = 's32[2]{0}', space=sflag, size = 0x8, scoped, tag = 'scoped memory for tpu_custom_call.1']
    #allocation5 [shape = 'u8[8192]{0}', space=vmem, size = 0x2000, scoped, tag = 'output window, operand 0']
    %6 = vsyncpa [#allocation3], 0
    %s7 = scalar_lea.sflag [#allocation3], 1
    %8 = vsyncpa %s7, 0
    %9 = vsyncpa [#allocation4], 0
    %s10 = scalar_lea.sflag [#allocation4], 1
    %11 = vsyncpa %s10, 0
    loop: start=0, step=1, limit=4
    $region2: #{tpu_custom_call.1} parent=1 // loop_pre_header
      _
    $region3: #{tpu_custom_call.1} parent=1 // loop_header
      %s13 = sphi 0, %s17
      %p14 = scmp.ge.s32.totalorder %s13, 4
      %s23 = sphi 0, %s25
      %s26 = sphi 0, %s23
      %s27 = sphi 0, %s26
      %s43 = sphi 0, %s27
      %s49 = sphi 0, %s51
      %s52 = sphi 0, %s49
      %s53 = sphi 0, %s52
      %s69 = sphi 0, %s53
    $region4: #{tpu_custom_call.1} parent=1 // loop_header_branch
      %16 = sbr.rel (%p14) target = $region8
    $region5: #{tpu_custom_call.1} parent=1 // loop_body
      %s18 = ssub.s32 %s13, 1
      %s19 = ssub.s32 %s13, 2
      %s20 = sadd.s32 %s13, 1
      %s21 = ssub.s32 %s13, %s20
      %p22 = scmp.eq.s32.totalorder %s21, 0
      %s24 = sadd.s32 %s23, 1
      %s25 = scalar_select %p22, %s23, %s24
      %p28 = pneg %p22
      %p29 = scmp.eq.s32.totalorder %s13, 1
      %p30 = por %p28, %p29
      %p31 = scmp.ne.s32.totalorder %s23, %s26
      %p32 = scmp.eq.s32.totalorder %s13, 0
      %p33 = por %p31, %p32
      %p34 = scmp.ne.s32.totalorder %s23, %s26
      %p35 = scmp.eq.s32.totalorder %s18, 1
      %p36 = por %p34, %p35
      %p37 = scmp.ne.s32.totalorder %s26, %s27
      %p38 = scmp.eq.s32.totalorder %s18, 0
      %p39 = por %p37, %p38
      %p40 = scmp.ne.s32.totalorder %s26, %s27
      %p41 = scmp.eq.s32.totalorder %s19, 1
      %p42 = por %p40, %p41
      %p44 = scmp.ne.s32.totalorder %s27, %s43
      %p45 = scmp.eq.s32.totalorder %s19, 0
      %p46 = por %p44, %p45
      %s47 = ssub.s32 %s13, %s20
      %p48 = scmp.eq.s32.totalorder %s47, 0
      %s50 = sadd.s32 %s49, 1
      %s51 = scalar_select %p48, %s49, %s50
      %p54 = pneg %p48
      %p55 = scmp.eq.s32.totalorder %s13, 1
      %p56 = por %p54, %p55
      %p57 = scmp.ne.s32.totalorder %s49, %s52
      %p58 = scmp.eq.s32.totalorder %s13, 0
      %p59 = por %p57, %p58
      %p60 = scmp.ne.s32.totalorder %s49, %s52
      %p61 = scmp.eq.s32.totalorder %s18, 1
      %p62 = por %p60, %p61
      %p63 = scmp.ne.s32.totalorder %s52, %s53
      %p64 = scmp.eq.s32.totalorder %s18, 0
      %p65 = por %p63, %p64
      %p66 = scmp.ne.s32.totalorder %s52, %s53
      %p67 = scmp.eq.s32.totalorder %s19, 1
      %p68 = por %p66, %p67
      %p70 = scmp.ne.s32.totalorder %s53, %s69
      %p71 = scmp.eq.s32.totalorder %s19, 0
      %p72 = por %p70, %p71
      %p73 = scmp.le.s32.totalorder 1, %s13
      %p74 = scmp.lt.s32.totalorder %s13, 3
      %p75 = pnand %p73, %p74
      %p76 = pneg %p75
      // Predicated region
      $region9: #{tpu_custom_call.1} parent=5 // pred_check
        _
      $region10: #{tpu_custom_call.1} parent=5 // pred_check_branch
        %78 = sbr.rel (%p75) target = $region12
      $region11: #{tpu_custom_call.1} parent=5 // pred_region
        %s79 = ssub.s32 %s13, 1
      $region12: #{tpu_custom_call.1} parent=5 // pred_fallthru
        _
      %p80 = scmp.lt.s32.totalorder %s13, 2
      // Predicated region
      $region13: #{tpu_custom_call.1} parent=5 // pred_check
        %p81 = pneg %p80
      $region14: #{tpu_custom_call.1} parent=5 // pred_check_branch
        %83 = sbr.rel (%p81) target = $region16
      $region15: #{tpu_custom_call.1} parent=5 // pred_region
        // Predicated region
        $region17: #{tpu_custom_call.1} parent=15 // pred_check
          %p84 = pneg %p33
        $region18: #{tpu_custom_call.1} parent=15 // pred_check_branch
          %86 = sbr.rel (%p84) target = $region20
        $region19: #{tpu_custom_call.1} parent=15 // pred_region
          %s87 = sand.u32 %s23, 1
          %s88 = scalar_lea.sflag [#allocation3], %s87
          %s89 = sand.u32 %s23, 1
          %s90 = smul.addr %s89, 8
          %s91 = scalar_lea.vmem [#allocation2], %s90
          %s93 = ssub.s32 128, 128
          %94 = vsyncadd %s88, %s93
          %s95 = smul.addr %s13, 128
          %s96 = scalar_lea.hbm %s0, %s95
          %s98 = sshll.u32 %s91, 4
          %s99 = int_to_ptr.vmem [resolvable:$true] %s98
          %101 = dma.hbm_to_vmem [thread:$0]  %s96, 128, %s99, %s88
        $region20: #{tpu_custom_call.1} parent=15 // pred_fallthru
          _
      $region16: #{tpu_custom_call.1} parent=5 // pred_fallthru
        _
      %p102 = scmp.le.s32.totalorder 1, %s13
      %p103 = scmp.lt.s32.totalorder %s13, 3
      %p104 = pnand %p102, %p103
      %p105 = pneg %p104
      // Predicated region
      $region21: #{tpu_custom_call.1} parent=5 // pred_check
        _
      $region22: #{tpu_custom_call.1} parent=5 // pred_check_branch
        %107 = sbr.rel (%p104) target = $region24
      $region23: #{tpu_custom_call.1} parent=5 // pred_region
        %s108 = ssub.s32 %s13, 1
        %s109 = sand.u32 %s26, 1
        %s110 = scalar_lea.sflag [#allocation3], %s109
        %s111 = sand.u32 %s26, 1
        %s112 = smul.addr %s111, 8
        %s113 = scalar_lea.vmem [#allocation2], %s112
        // Predicated region
        $region25: #{tpu_custom_call.1} parent=23 // pred_check
          %p114 = pneg %p39
        $region26: #{tpu_custom_call.1} parent=23 // pred_check_branch
          %116 = sbr.rel (%p114) target = $region28
        $region27: #{tpu_custom_call.1} parent=23 // pred_region
          %117 = dma.done %s110, 128
        $region28: #{tpu_custom_call.1} parent=23 // pred_fallthru
          _
        %s118 = sand.u32 %s26, 1
        %s119 = scalar_lea.sflag [#allocation3], %s118
        %s120 = sand.u32 %s26, 1
        %s121 = smul.addr %s120, 8
        %s122 = scalar_lea.vmem [#allocation2], %s121
        %p123 = pneg %p39
        %p124 = pneg %p36
        %p125 = pneg %p65
        %p126 = pneg %p62
        %s127 = sand.u32 %s52, 1
        %s128 = scalar_lea.sflag [#allocation4], %s127
        %s129 = sand.u32 %s52, 1
        %s130 = smul.addr %s129, 8
        %s131 = scalar_lea.vmem [#allocation5], %s130
        %v132 = vld [vmem:[%s113] sm:$0xff]
        %vm133 = vcmask 261120
        %v134 = vsel %vm133, %v132, 0.0
        %135 = vadd.xlane.f32.xlu0 %v134
        %v136 = vpop.xlane.xlu0 %135
        %v137 = vmul.f32 %v132, %v132
        %v138 = vsel %vm133, %v137, 0.0
        %139 = vadd.xlane.f32.xlu0 %v138
        %v140 = vpop.xlane.xlu0 %139
        %v141 = vrcp.pop 32.0
        %v142 = vmul.f32 %v136, %v141
        %v143 = vmul.f32 %v140, %v141
        %v144 = vmul.f32 %v142, %v142
        %v145 = vsub.f32 %v143, %v144
        %v146 = vmax.f32 %v145, 0.0
        %v147 = vrsqrt.pop %v146
        %v148 = vmul.f32 %v146, %v147
        %vm149 = vcmp.eq.f32.partialorder %v146, inf
        %v150 = vsel %vm149, %v146, %v148
        %vm151 = vcmp.eq.f32.partialorder %v146, 0.0
        %v152 = vand.u32 %v146, 2147483648
        %v153 = vsel %vm151, %v152, %v150
        %v154 = vadd.f32 %v153, 1e-05
        %v155 = vrcp.pop %v154
        %v156 = vsub.f32 %v132, %v142
        %v157 = vmul.f32 %v156, %v155
        %158 = vst.msk [vmem:[%s131] sm:$0xff] %vm133, %v157
        %s159 = sand.u32 %s52, 1
        %s160 = scalar_lea.sflag [#allocation4], %s159
        %s161 = sand.u32 %s52, 1
        %s162 = smul.addr %s161, 8
        %s163 = scalar_lea.vmem [#allocation5], %s162
        // Predicated region
        $region29: #{tpu_custom_call.1} parent=23 // pred_check
          %p164 = pneg %p62
        $region30: #{tpu_custom_call.1} parent=23 // pred_check_branch
          %166 = sbr.rel (%p164) target = $region32
        $region31: #{tpu_custom_call.1} parent=23 // pred_region
          %s168 = ssub.s32 128, 128
          %169 = vsyncadd %s160, %s168
          %s170 = smul.addr %s18, 128
          %s171 = scalar_lea.hbm %s1, %s170
          %s173 = sshll.u32 %s163, 4
          %s174 = int_to_ptr.vmem [resolvable:$true] %s173
          %176 = dma.vmem_to_hbm [thread:$0]  %s174, 128, %s171, %s160
        $region32: #{tpu_custom_call.1} parent=23 // pred_fallthru
          _
      $region24: #{tpu_custom_call.1} parent=5 // pred_fallthru
        _
      %p177 = scmp.le.s32.totalorder 2, %s13
      // Predicated region
      $region33: #{tpu_custom_call.1} parent=5 // pred_check
        %p178 = pneg %p177
      $region34: #{tpu_custom_call.1} parent=5 // pred_check_branch
        %180 = sbr.rel (%p178) target = $region36
      $region35: #{tpu_custom_call.1} parent=5 // pred_region
        %s181 = ssub.s32 %s13, 2
        // Predicated region
        $region37: #{tpu_custom_call.1} parent=35 // pred_check
          %p182 = pneg %p68
        $region38: #{tpu_custom_call.1} parent=35 // pred_check_branch
          %184 = sbr.rel (%p182) target = $region40
        $region39: #{tpu_custom_call.1} parent=35 // pred_region
          %s185 = sand.u32 %s53, 1
          %s186 = scalar_lea.sflag [#allocation4], %s185
          %s187 = sand.u32 %s53, 1
          %s188 = smul.addr %s187, 8
          %s189 = scalar_lea.vmem [#allocation5], %s188
          %190 = dma.done %s186, 128
        $region40: #{tpu_custom_call.1} parent=35 // pred_fallthru
          _
      $region36: #{tpu_custom_call.1} parent=5 // pred_fallthru
        _
    $region6: #{tpu_custom_call.1} parent=1 // loop_footer
      %s17 = sadd.s32 1, %s13
    $region7: #{tpu_custom_call.1} parent=1 // loop_footer_branch
      %12 = sbr.rel target = $region3
    $region8: #{tpu_custom_call.1} parent=1 // loop_exit
      _
    %191 = vsyncpa [#allocation3], 1
    %s192 = scalar_lea.sflag [#allocation3], 1
    %193 = vsyncpa %s192, 1
    %194 = vsyncpa [#allocation4], 1
    %s195 = scalar_lea.sflag [#allocation4], 1
    %196 = vsyncpa %s195, 1

</llo_original>
